<compile_context>
chip_gen: v6e
topology: v6e:2x2x1
jax: 0.10.0
libtpu: 0.0.40
codegen_flags: <defaults>
</compile_context>

<pallas_src>
import functools

import jax
import jax.numpy as jnp
from jax.experimental import pallas as pl
from jax.experimental.pallas import tpu as pltpu


def _focal_kernel(preds_ref, labels_ref, alpha_ref, o_ref, *, gamma, gamma_is_int):
    """Process one lane-dense (C, TL) tile of rows.

    preds_ref:  (C, TL)   logits, classes on sublanes, rows on lanes
    labels_ref: (1, TL)   int32 labels (-1 for padded rows)
    alpha_ref:  (C, 1)    per-class alpha weights
    o_ref:      (1, 1, TL) per-shard per-lane loss accumulator (resident
                across the inner 'arbitrary' grid axis)
    """
    i = pl.program_id(1)

    @pl.when(i == 0)
    def _():
        o_ref[...] = jnp.zeros_like(o_ref)

    x = preds_ref[...].astype(jnp.float32)          # (C, TL) upcast in VMEM
    labels = labels_ref[...]                        # (1, TL) int32
    alpha = alpha_ref[...].astype(jnp.float32)      # (C, 1)

    # log_softmax along the (small) class axis -> cheap sublane reduce.
    m = jnp.max(x, axis=0, keepdims=True)           # (1, TL)
    z = x - m
    lse = jnp.log(jnp.sum(jnp.exp(z), axis=0, keepdims=True))
    logsoft = z - lse                               # (C, TL)

    # One-hot gather of the label class.  Padded rows carry label = -1 so the
    # one-hot column is all zeros -> logp = 0, alpha = 0, q = 0 -> loss 0.
    cls = jax.lax.broadcasted_iota(jnp.int32, x.shape, 0)
    onehot = (cls == labels).astype(jnp.float32)    # (C, TL)

    logp = jnp.sum(logsoft * onehot, axis=0, keepdims=True)   # (1, TL)
    a = jnp.sum(alpha * onehot, axis=0, keepdims=True)        # (1, TL)
    p = jnp.exp(logp)
    q = jnp.maximum(1.0 - p, 0.0)   # clamp: p may exceed 1 by a ulp

    if gamma_is_int:
        # Integer gamma (the RetinaNet default gamma=2): pure VPU multiplies,
        # no EUP transcendentals, no NaN hazard.
        w = jnp.ones_like(q)
        for _ in range(int(round(gamma))):
            w = w * q
    else:
        w = jnp.exp(jnp.float32(gamma) * jnp.log(jnp.maximum(q, 1e-30)))

    loss = -a * w * logp                            # (1, TL)
    o_ref[...] = o_ref[...] + loss[None]            # (1, 1, TL) VPU add


def focal_loss_pallas(preds, labels, alpha, *, gamma=2.0, size_average=True,
                      lane_tile=32768, num_shards=2,
                      vmem_budget_bytes=8 * 1024 * 1024):
    """Focal loss forward.  preds: [..., C] float (any dtype); labels: [...] int."""
    C = preds.shape[-1]
    preds2 = preds.reshape(-1, C)                   # [M, C], keep input dtype (bf16 ok)
    labels2 = labels.reshape(-1).astype(jnp.int32)  # [M]
    M = preds2.shape[0]

    # Lane tile: largest multiple of 128 whose double-buffered preds working
    # set fits the budget (kept well inside the 16/32 MiB default scoped VMEM
    # on v5e/v6e/v7x), capped by the requested tile and by the problem size.
    itemsize = jnp.dtype(preds2.dtype).itemsize
    tl = (vmem_budget_bytes // (2 * C * itemsize)) // 128 * 128
    tl = max(128, min(int(lane_tile) // 128 * 128, tl))
    tl = min(tl, max(128, pl.cdiv(M, 128) * 128))

    P = max(1, int(num_shards))        # leading 'parallel' axis: v7x megacore split
    steps = pl.cdiv(M, tl)
    inner = pl.cdiv(steps, P)
    M_pad = inner * P * tl

    # Lane-dense layout: rows -> lanes, classes -> sublanes.  For small C the
    # [M, C] layout leaves >97% of every vreg idle; the one-off transpose copy
    # (fused with the tail padding) pays for itself many times over.
    preds_t = jnp.pad(preds2.T, ((0, 0), (0, M_pad - M)))            # (C, M_pad)
    labels_p = jnp.pad(labels2, (0, M_pad - M), constant_values=-1)  # padded rows -> -1
    labels_p = labels_p.reshape(1, M_pad)
    alpha2 = jnp.asarray(alpha, jnp.float32).reshape(C, 1)

    gamma_f = float(gamma)
    gamma_is_int = (gamma_f >= 0.0) and float(gamma_f).is_integer() and gamma_f <= 8.0

    kernel = functools.partial(_focal_kernel, gamma=gamma_f,
                               gamma_is_int=gamma_is_int)

    partials = pl.pallas_call(
        kernel,
        out_shape=jax.ShapeDtypeStruct((P, 1, tl), jnp.float32),
        grid_spec=pltpu.PrefetchScalarGridSpec(
            num_scalar_prefetch=0,
            grid=(P, inner),
            in_specs=[
                pl.BlockSpec((C, tl), lambda p, i: (0, p * inner + i)),
                pl.BlockSpec((1, tl), lambda p, i: (0, p * inner + i)),
                pl.BlockSpec((C, 1), lambda p, i: (0, 0)),
            ],
            out_specs=pl.BlockSpec((1, 1, tl), lambda p, i: (p, 0, 0)),
        ),
        compiler_params=pltpu.CompilerParams(
            dimension_semantics=("parallel", "arbitrary"),
            vmem_limit_bytes=32 * 1024 * 1024),
    )(preds_t, labels_p, alpha2)

    total = jnp.sum(partials)          # final cross-lane/shard reduce, once
    if size_average:
        return total / jnp.float32(M)
    return total


def focal_loss_ref(preds, labels, alpha, *, gamma=2.0, size_average=True):
    """Pure-JAX reference mirroring the PyTorch module."""
    C = preds.shape[-1]
    preds2 = preds.reshape(-1, C).astype(jnp.float32)
    labels2 = labels.reshape(-1).astype(jnp.int32)
    logsoft = jax.nn.log_softmax(preds2, axis=1)
    logp = jnp.take_along_axis(logsoft, labels2[:, None], axis=1)[:, 0]
    p = jnp.exp(logp)
    a = jnp.asarray(alpha, jnp.float32)[labels2]
    loss = -a * jnp.power(1.0 - p, gamma) * logp
    return jnp.mean(loss) if size_average else jnp.sum(loss)


if __name__ == "__main__":
    # Deterministic parameter setup (matches focal_loss.__init__ defaults):
    #   alpha=0.25, gamma=2, num_classes=3 -> alpha vector [0.25, 0.75, 0.75]
    num_classes = 3
    alpha_scalar = 0.25
    gamma = 2.0
    alpha_vec = jnp.concatenate([
        jnp.array([alpha_scalar], dtype=jnp.float32),
        jnp.full((num_classes - 1,), 1.0 - alpha_scalar, dtype=jnp.float32),
    ])

    key = jax.random.PRNGKey(0)
    k1, k2, k3, k4 = jax.random.split(key, 4)

    # Small detection-style example: preds [B, N, C], labels [B, N].
    B, N = 2, 8
    preds = jax.random.normal(k1, (B, N, num_classes), dtype=jnp.float32)
    labels = jax.random.randint(k2, (B, N), 0, num_classes, dtype=jnp.int32)

    out = focal_loss_pallas(preds, labels, alpha_vec, gamma=gamma, size_average=True)
    out = jax.block_until_ready(out)
    ref = focal_loss_ref(preds, labels, alpha_vec, gamma=gamma, size_average=True)
    assert jnp.allclose(out, ref, rtol=1e-5, atol=1e-6), (out, ref)

    # Second small case: exercises multi-step accumulation, both shards and
    # the ragged-tail padding path (M=400, forced lane_tile=128 -> grid (2,2)).
    B2, N2 = 2, 200
    preds_b = jax.random.normal(k3, (B2, N2, num_classes), dtype=jnp.float32)
    labels_b = jax.random.randint(k4, (B2, N2), 0, num_classes, dtype=jnp.int32)
    out_b = focal_loss_pallas(preds_b, labels_b, alpha_vec, gamma=gamma,
                              size_average=True, lane_tile=128)
    out_b = jax.block_until_ready(out_b)
    ref_b = focal_loss_ref(preds_b, labels_b, alpha_vec, gamma=gamma,
                           size_average=True)
    assert jnp.allclose(out_b, ref_b, rtol=1e-5, atol=1e-6), (out_b, ref_b)

    print("KERNEL_OK")
</pallas_src>

<mosaic_0001>
module attributes {stable_mosaic.version = 11 : i64} {
  func.func @_focal_kernel(%arg0: i32, %arg1: i32, %arg2: memref<3x128xf32, #tpu.memory_space<vmem>>, %arg3: memref<1x128xi32, #tpu.memory_space<vmem>>, %arg4: memref<3x1xf32, #tpu.memory_space<vmem>>, %arg5: memref<1x1x128xf32, #tpu.memory_space<vmem>>) attributes {dimension_semantics = [#tpu.dimension_semantics<parallel>, #tpu.dimension_semantics<arbitrary>], iteration_bounds = array<i64: 2, 1>, scalar_prefetch = 0 : i64, scratch_operands = 0 : i64, tpu.core_type = #tpu.core_type<tc>, window_params = [{transform_indices = @transform_0, window_bounds = array<i64: 3, 128>}, {transform_indices = @transform_1, window_bounds = array<i64: 1, 128>}, {pipeline_mode = #tpu.pipeline_mode<synchronous>, transform_indices = @transform_2, window_bounds = array<i64: 3, 1>}, {transform_indices = @transform_3, window_bounds = array<i64: 1, 1, 128>}]} {
    %c0_i32 = arith.constant 0 : i32
    %0 = arith.cmpi eq, %arg1, %c0_i32 : i32
    %1 = arith.extui %0 : i1 to i32
    %c0_i32_0 = arith.constant 0 : i32
    %2 = arith.cmpi ne, %1, %c0_i32_0 : i32
    scf.if %2 {
      %cst_19 = arith.constant 0.000000e+00 : f32
      %44 = vector.broadcast %cst_19 : f32 to vector<1x1x128xf32>
      %c0_20 = arith.constant 0 : index
      %c0_21 = arith.constant 0 : index
      %c0_22 = arith.constant 0 : index
      %45 = vector.load %arg5[%c0_20, %c0_21, %c0_22] : memref<1x1x128xf32, #tpu.memory_space<vmem>>, vector<1x1x128xf32>
      tpu.vector_store %arg5[%c0_20, %c0_21, %c0_22], %44 {strides = array<i32>} : memref<1x1x128xf32, #tpu.memory_space<vmem>>, vector<1x1x128xf32>,
    } else {
    }
    %c0 = arith.constant 0 : index
    %c0_1 = arith.constant 0 : index
    %3 = vector.load %arg2[%c0, %c0_1] : memref<3x128xf32, #tpu.memory_space<vmem>>, vector<3x128xf32>
    %c0_2 = arith.constant 0 : index
    %c0_3 = arith.constant 0 : index
    %4 = vector.load %arg3[%c0_2, %c0_3] : memref<1x128xi32, #tpu.memory_space<vmem>>, vector<1x128xi32>
    %c0_4 = arith.constant 0 : index
    %c0_5 = arith.constant 0 : index
    %5 = vector.load %arg4[%c0_4, %c0_5] : memref<3x1xf32, #tpu.memory_space<vmem>>, vector<3x1xf32>
    %cst = arith.constant dense<0xFF800000> : vector<128xf32>
    %6 = vector.multi_reduction <maximumf>, %3, %cst [0] : vector<3x128xf32> to vector<128xf32>
    %7 = vector.shape_cast %6 : vector<128xf32> to vector<1x128xf32>
    %8 = vector.broadcast %7 : vector<1x128xf32> to vector<3x128xf32>
    %9 = arith.subf %3, %8 : vector<3x128xf32>
    %10 = math.exp %9 : vector<3x128xf32>
    %cst_6 = arith.constant dense<0.000000e+00> : vector<128xf32>
    %11 = vector.multi_reduction <add>, %10, %cst_6 [0] : vector<3x128xf32> to vector<128xf32>
    %12 = vector.shape_cast %11 : vector<128xf32> to vector<1x128xf32>
    %13 = math.log %12 : vector<1x128xf32>
    %14 = vector.broadcast %13 : vector<1x128xf32> to vector<3x128xf32>
    %15 = arith.subf %9, %14 : vector<3x128xf32>
    %16 = tpu.iota {dimensions = array<i32: 0>} : vector<3x128xi32>
    %17 = vector.broadcast %4 : vector<1x128xi32> to vector<3x128xi32>
    %18 = arith.cmpi eq, %16, %17 : vector<3x128xi32>
    %19 = arith.extui %18 : vector<3x128xi1> to vector<3x128xi32>
    %20 = arith.sitofp %19 : vector<3x128xi32> to vector<3x128xf32>
    %21 = arith.mulf %15, %20 : vector<3x128xf32>
    %cst_7 = arith.constant dense<0.000000e+00> : vector<128xf32>
    %22 = vector.multi_reduction <add>, %21, %cst_7 [0] : vector<3x128xf32> to vector<128xf32>
    %23 = vector.shape_cast %22 : vector<128xf32> to vector<1x128xf32>
    %24 = vector.broadcast %5 : vector<3x1xf32> to vector<3x128xf32>
    %25 = arith.mulf %24, %20 : vector<3x128xf32>
    %cst_8 = arith.constant dense<0.000000e+00> : vector<128xf32>
    %26 = vector.multi_reduction <add>, %25, %cst_8 [0] : vector<3x128xf32> to vector<128xf32>
    %27 = vector.shape_cast %26 : vector<128xf32> to vector<1x128xf32>
    %28 = math.exp %23 : vector<1x128xf32>
    %cst_9 = arith.constant 1.000000e+00 : f32
    %29 = vector.broadcast %cst_9 : f32 to vector<1x128xf32>
    %30 = arith.subf %29, %28 : vector<1x128xf32>
    %cst_10 = arith.constant 0.000000e+00 : f32
    %31 = vector.broadcast %cst_10 : f32 to vector<1x128xf32>
    %32 = arith.maximumf %30, %31 : vector<1x128xf32>
    %cst_11 = arith.constant 1.000000e+00 : f32
    %33 = vector.broadcast %cst_11 : f32 to vector<1x128xf32>
    %34 = arith.mulf %33, %32 : vector<1x128xf32>
    %35 = arith.mulf %34, %32 : vector<1x128xf32>
    %cst_12 = arith.constant 0.000000e+00 : f32
    %36 = vector.broadcast %cst_12 : f32 to vector<1x128xf32>
    %37 = arith.subf %36, %27 : vector<1x128xf32>
    %38 = arith.mulf %37, %35 : vector<1x128xf32>
    %39 = arith.mulf %38, %23 : vector<1x128xf32>
    %c0_13 = arith.constant 0 : index
    %c0_14 = arith.constant 0 : index
    %c0_15 = arith.constant 0 : index
    %40 = vector.load %arg5[%c0_13, %c0_14, %c0_15] : memref<1x1x128xf32, #tpu.memory_space<vmem>>, vector<1x1x128xf32>
    %41 = vector.shape_cast %39 : vector<1x128xf32> to vector<1x1x128xf32>
    %42 = arith.addf %40, %41 : vector<1x1x128xf32>
    %c0_16 = arith.constant 0 : index
    %c0_17 = arith.constant 0 : index
    %c0_18 = arith.constant 0 : index
    %43 = vector.load %arg5[%c0_16, %c0_17, %c0_18] : memref<1x1x128xf32, #tpu.memory_space<vmem>>, vector<1x1x128xf32>
    tpu.vector_store %arg5[%c0_16, %c0_17, %c0_18], %42 {strides = array<i32>} : memref<1x1x128xf32, #tpu.memory_space<vmem>>, vector<1x1x128xf32>,
    return
  }
  func.func @transform_0(%arg0: i32, %arg1: i32) -> (i32, i32) {
    %c1_i32 = arith.constant 1 : i32
    %0 = arith.muli %arg0, %c1_i32 : i32
    %1 = arith.addi %0, %arg1 : i32
    %c0_i32 = arith.constant 0 : i32
    %c0_i32_0 = arith.constant 0 : i32
    return %c0_i32, %1 : i32, i32
  }
  func.func @transform_1(%arg0: i32, %arg1: i32) -> (i32, i32) {
    %c1_i32 = arith.constant 1 : i32
    %0 = arith.muli %arg0, %c1_i32 : i32
    %1 = arith.addi %0, %arg1 : i32
    %c0_i32 = arith.constant 0 : i32
    %c0_i32_0 = arith.constant 0 : i32
    return %c0_i32, %1 : i32, i32
  }
  func.func @transform_2(%arg0: i32, %arg1: i32) -> (i32, i32) {
    %c0_i32 = arith.constant 0 : i32
    %c0_i32_0 = arith.constant 0 : i32
    %c0_i32_1 = arith.constant 0 : i32
    return %c0_i32, %c0_i32_0 : i32, i32
  }
  func.func @transform_3(%arg0: i32, %arg1: i32) -> (i32, i32, i32) {
    %c0_i32 = arith.constant 0 : i32
    %c0_i32_0 = arith.constant 0 : i32
    %c0_i32_1 = arith.constant 0 : i32
    return %arg0, %c0_i32, %c0_i32_0 : i32, i32, i32
  }
}

</mosaic_0001>

<llo_original>
// kernel: tpu_custom_call.1
$region0: #{tpu_custom_call.1}
  #allocation0 [shape = 'u32[]', space=smem, size = 0x4, offset = 0x4, fixed_abs, tag = 'smem constant byte address 0x4 - core index']
  #allocation1 [shape = 'u32[144,128]{1,0:T(1,128)}', space=vmem, size = 0x12000, scoped, tag = 'internal scratch']
  %s0 = inlined_call_operand.hbm [shape: f32[3,256], index: 0, kind: input, shape index: {}]
  %s1 = inlined_call_operand.vmem [shape: s32[1,256], index: 1, kind: input, shape index: {}]
  %s2 = inlined_call_operand.vmem [shape: f32[3,1], index: 2, kind: input, shape index: {}]
  %s3 = inlined_call_operand.hbm [shape: f32[2,1,128], index: 3, kind: output, shape index: {}]
  %s4 = sld [smem:[#allocation0]]
  $region53: #{tpu_custom_call.1} parent=0
    _
  %s6 = ssub.s32 1, %s4
  %s7 = scalar_select 0, %s6, %s4
  $region1: #{tpu_custom_call.1} parent=0
    #allocation2 [shape = 'u8[4096]{0}', space=vmem, size = 0x1000, scoped, tag = 'input window, operand 0']
    #allocation3 [shape = 's32[2]{0}', space=sflag, size = 0x8, scoped, tag = 'scoped memory for tpu_custom_call.1']
    #allocation4 [shape = 's32[2]{0}', space=sflag, size = 0x8, scoped, tag = 'scoped memory for tpu_custom_call.1']
    #allocation5 [shape = 'u8[1024]{0}', space=vmem, size = 0x400, scoped, tag = 'output window, operand 0']
    %8 = vsyncpa [#allocation3], 0
    %s9 = scalar_lea.sflag [#allocation3], 1
    %10 = vsyncpa %s9, 0
    %11 = vsyncpa [#allocation4], 0
    %s12 = scalar_lea.sflag [#allocation4], 1
    %13 = vsyncpa %s12, 0
    loop: start=0, step=1, limit=4
    $region2: #{tpu_custom_call.1} parent=1 // loop_pre_header
      _
    $region3: #{tpu_custom_call.1} parent=1 // loop_header
      %s15 = sphi 0, %s19
      %p16 = scmp.ge.s32.totalorder %s15, 4
      %s22 = sphi 0, %s34
      %s23 = sphi 0, %s30
      %s24 = sphi 0, %s22
      %s25 = sphi 0, %s23
      %s26 = sphi 0, %s24
      %s27 = sphi 0, %s25
      %s39 = sphi 0, %s41
      %s42 = sphi 0, %s39
      %s43 = sphi 0, %s42
      %s59 = sphi 0, %s43
      %s67 = sphi 0, %s69
      %s70 = sphi 0, %s67
      %s71 = sphi 0, %s70
      %s87 = sphi 0, %s71
      %s91 = sphi 0, %s91
      %s93 = sphi 0, %s91
      %s94 = sphi 0, %s93
      %s108 = sphi 0, %s94
      %s114 = sphi 0, %s116
      %s117 = sphi 0, %s114
      %s118 = sphi 0, %s117
      %s134 = sphi 0, %s118
    $region4: #{tpu_custom_call.1} parent=1 // loop_header_branch
      %18 = sbr.rel (%p16) target = $region8
    $region5: #{tpu_custom_call.1} parent=1 // loop_body
      %s20 = ssub.s32 %s15, 1
      %s21 = ssub.s32 %s15, 2
      %s28 = sadd.s32 1, %s23
      %p29 = scmp.ge.s32.totalorder %s28, 1
      %s30 = scalar_select %p29, 0, %s28
      %s31 = sadd.s32 1, %s22
      %s32 = scalar_select %p29, %s31, %s22
      %p33 = scmp.ge.s32.totalorder %s32, 2
      %s34 = scalar_select %p33, 0, %s32
      %s35 = sadd.s32 %s22, %s23
      %s36 = sadd.s32 %s34, %s30
      %s37 = ssub.s32 %s35, %s36
      %p38 = scmp.eq.s32.totalorder %s37, 0
      %s40 = sadd.s32 %s39, 1
      %s41 = scalar_select %p38, %s39, %s40
      %p44 = pneg %p38
      %p45 = scmp.eq.s32.totalorder %s15, 1
      %p46 = por %p44, %p45
      %p47 = scmp.ne.s32.totalorder %s39, %s42
      %p48 = scmp.eq.s32.totalorder %s15, 0
      %p49 = por %p47, %p48
      %p50 = scmp.ne.s32.totalorder %s39, %s42
      %p51 = scmp.eq.s32.totalorder %s20, 1
      %p52 = por %p50, %p51
      %p53 = scmp.ne.s32.totalorder %s42, %s43
      %p54 = scmp.eq.s32.totalorder %s20, 0
      %p55 = por %p53, %p54
      %p56 = scmp.ne.s32.totalorder %s42, %s43
      %p57 = scmp.eq.s32.totalorder %s21, 1
      %p58 = por %p56, %p57
      %p60 = scmp.ne.s32.totalorder %s43, %s59
      %p61 = scmp.eq.s32.totalorder %s21, 0
      %p62 = por %p60, %p61
      %s63 = sadd.s32 %s22, %s23
      %s64 = sadd.s32 %s34, %s30
      %s65 = ssub.s32 %s63, %s64
      %p66 = scmp.eq.s32.totalorder %s65, 0
      %s68 = sadd.s32 %s67, 1
      %s69 = scalar_select %p66, %s67, %s68
      %p72 = pneg %p66
      %p73 = scmp.eq.s32.totalorder %s15, 1
      %p74 = por %p72, %p73
      %p75 = scmp.ne.s32.totalorder %s67, %s70
      %p76 = scmp.eq.s32.totalorder %s15, 0
      %p77 = por %p75, %p76
      %p78 = scmp.ne.s32.totalorder %s67, %s70
      %p79 = scmp.eq.s32.totalorder %s20, 1
      %p80 = por %p78, %p79
      %p81 = scmp.ne.s32.totalorder %s70, %s71
      %p82 = scmp.eq.s32.totalorder %s20, 0
      %p83 = por %p81, %p82
      %p84 = scmp.ne.s32.totalorder %s70, %s71
      %p85 = scmp.eq.s32.totalorder %s21, 1
      %p86 = por %p84, %p85
      %p88 = scmp.ne.s32.totalorder %s71, %s87
      %p89 = scmp.eq.s32.totalorder %s21, 0
      %p90 = por %p88, %p89
      %s92 = sadd.s32 %s91, 1
      %p95 = scmp.eq.s32.totalorder %s15, 1
      %p96 = scmp.ne.s32.totalorder %s91, %s93
      %p97 = scmp.eq.s32.totalorder %s15, 0
      %p98 = por %p96, %p97
      %p99 = scmp.ne.s32.totalorder %s91, %s93
      %p100 = scmp.eq.s32.totalorder %s20, 1
      %p101 = por %p99, %p100
      %p102 = scmp.ne.s32.totalorder %s93, %s94
      %p103 = scmp.eq.s32.totalorder %s20, 0
      %p104 = por %p102, %p103
      %p105 = scmp.ne.s32.totalorder %s93, %s94
      %p106 = scmp.eq.s32.totalorder %s21, 1
      %p107 = por %p105, %p106
      %p109 = scmp.ne.s32.totalorder %s94, %s108
      %p110 = scmp.eq.s32.totalorder %s21, 0
      %p111 = por %p109, %p110
      %s112 = ssub.s32 %s22, %s34
      %p113 = scmp.eq.s32.totalorder %s112, 0
      %s115 = sadd.s32 %s114, 1
      %s116 = scalar_select %p113, %s114, %s115
      %p119 = pneg %p113
      %p120 = scmp.eq.s32.totalorder %s15, 1
      %p121 = por %p119, %p120
      %p122 = scmp.ne.s32.totalorder %s114, %s117
      %p123 = scmp.eq.s32.totalorder %s15, 0
      %p124 = por %p122, %p123
      %p125 = scmp.ne.s32.totalorder %s114, %s117
      %p126 = scmp.eq.s32.totalorder %s20, 1
      %p127 = por %p125, %p126
      %p128 = scmp.ne.s32.totalorder %s117, %s118
      %p129 = scmp.eq.s32.totalorder %s20, 0
      %p130 = por %p128, %p129
      %p131 = scmp.ne.s32.totalorder %s117, %s118
      %p132 = scmp.eq.s32.totalorder %s21, 1
      %p133 = por %p131, %p132
      %p135 = scmp.ne.s32.totalorder %s118, %s134
      %p136 = scmp.eq.s32.totalorder %s21, 0
      %p137 = por %p135, %p136
      %p138 = scmp.le.s32.totalorder 1, %s15
      %p139 = scmp.lt.s32.totalorder %s15, 3
      %p140 = pnand %p138, %p139
      %p141 = pneg %p140
      // Predicated region
      $region9: #{tpu_custom_call.1} parent=5 // pred_check
        _
      $region10: #{tpu_custom_call.1} parent=5 // pred_check_branch
        %143 = sbr.rel (%p140) target = $region12
      $region11: #{tpu_custom_call.1} parent=5 // pred_region
        %s144 = ssub.s32 %s15, 1
        // Predicated region
        $region13: #{tpu_custom_call.1} parent=11 // pred_check
          %p145 = pneg %p104
        $region14: #{tpu_custom_call.1} parent=11 // pred_check_branch
          %147 = sbr.rel (%p145) target = $region16
        $region15: #{tpu_custom_call.1} parent=11 // pred_region
          _
        $region16: #{tpu_custom_call.1} parent=11 // pred_fallthru
          _
      $region12: #{tpu_custom_call.1} parent=5 // pred_fallthru
        _
      %p148 = scmp.lt.s32.totalorder %s15, 2
      // Predicated region
      $region17: #{tpu_custom_call.1} parent=5 // pred_check
        %p149 = pneg %p148
      $region18: #{tpu_custom_call.1} parent=5 // pred_check_branch
        %151 = sbr.rel (%p149) target = $region20
      $region19: #{tpu_custom_call.1} parent=5 // pred_region
        // Predicated region
        $region21: #{tpu_custom_call.1} parent=19 // pred_check
          %p152 = pneg %p49
        $region22: #{tpu_custom_call.1} parent=19 // pred_check_branch
          %154 = sbr.rel (%p152) target = $region24
        $region23: #{tpu_custom_call.1} parent=19 // pred_region
          %s155 = sand.u32 %s39, 1
          %s156 = scalar_lea.sflag [#allocation3], %s155
          %s157 = sand.u32 %s39, 1
          %s158 = smul.addr %s157, 4
          %s159 = scalar_lea.vmem [#allocation2], %s158
          %s160 = sadd.s32 %s22, %s23
          %s162 = ssub.s32 64, 64
          %163 = vsyncadd %s156, %s162
          %s164 = smul.addr %s160, 64
          %s165 = scalar_lea.hbm %s0, %s164
          %s167 = sshll.u32 %s159, 4
          %s168 = int_to_ptr.vmem [resolvable:$true] %s167
          %170 = dma.hbm_to_vmem [thread:$0]  %s165, 64, %s168, %s156
        $region24: #{tpu_custom_call.1} parent=19 // pred_fallthru
          _
        // Predicated region
        $region25: #{tpu_custom_call.1} parent=19 // pred_check
          %p171 = pneg %p77
        $region26: #{tpu_custom_call.1} parent=19 // pred_check_branch
          %173 = sbr.rel (%p171) target = $region28
        $region27: #{tpu_custom_call.1} parent=19 // pred_region
          %s174 = sadd.s32 %s22, %s23
          %p175 = scmp.lt.s32.totalorder %s174, 1
          %s176 = scalar_select %p175, %s174, 1
          %s177 = scalar_lea.vmem %s1, %s176
          %s178 = sadd.s32 %s22, %s23
        $region28: #{tpu_custom_call.1} parent=19 // pred_fallthru
          _
      $region20: #{tpu_custom_call.1} parent=5 // pred_fallthru
        _
      %p179 = scmp.le.s32.totalorder 1, %s15
      %p180 = scmp.lt.s32.totalorder %s15, 3
      %p181 = pnand %p179, %p180
      %p182 = pneg %p181
      // Predicated region
      $region29: #{tpu_custom_call.1} parent=5 // pred_check
        _
      $region30: #{tpu_custom_call.1} parent=5 // pred_check_branch
        %184 = sbr.rel (%p181) target = $region32
      $region31: #{tpu_custom_call.1} parent=5 // pred_region
        %s185 = ssub.s32 %s15, 1
        %s186 = sand.u32 %s42, 1
        %s187 = scalar_lea.sflag [#allocation3], %s186
        %s188 = sand.u32 %s42, 1
        %s189 = smul.addr %s188, 4
        %s190 = scalar_lea.vmem [#allocation2], %s189
        // Predicated region
        $region33: #{tpu_custom_call.1} parent=31 // pred_check
          %p191 = pneg %p55
        $region34: #{tpu_custom_call.1} parent=31 // pred_check_branch
          %193 = sbr.rel (%p191) target = $region36
        $region35: #{tpu_custom_call.1} parent=31 // pred_region
          %194 = dma.done %s187, 64
        $region36: #{tpu_custom_call.1} parent=31 // pred_fallthru
          _
        %s195 = sand.u32 %s42, 1
        %s196 = scalar_lea.sflag [#allocation3], %s195
        %s197 = sand.u32 %s42, 1
        %s198 = smul.addr %s197, 4
        %s199 = scalar_lea.vmem [#allocation2], %s198
        %p200 = pneg %p55
        %p201 = pneg %p52
        %s202 = sadd.s32 %s24, %s25
        %p203 = scmp.lt.s32.totalorder %s202, 1
        %s204 = scalar_select %p203, %s202, 1
        %s205 = scalar_lea.vmem %s1, %s204
        %p206 = pneg %p83
        %p207 = pneg %p80
        %p208 = pneg %p104
        %p209 = pneg %p101
        %p210 = pneg %p130
        %p211 = pneg %p127
        %s212 = sand.u32 %s117, 1
        %s213 = scalar_lea.sflag [#allocation4], %s212
        %s214 = sand.u32 %s117, 1
        %s215 = scalar_lea.vmem [#allocation5], %s214
        %s216 = sadd.s32 %s24, %s25
        %s217 = sadd.s32 %s24, %s25
        %p218 = scmp.lt.s32.totalorder %s217, 1
        %s219 = scalar_select %p218, %s217, 1
        %s220 = scalar_lea.vmem %s1, %s219
        %s221 = sadd.s32 %s24, %s25
        %p222 = scmp.eq.s32.totalorder %s25, 0
        // Predicated region
        $region37: #{tpu_custom_call.1} parent=31 // pred_check
          %p223 = pneg %p222
        $region38: #{tpu_custom_call.1} parent=31 // pred_check_branch
          %225 = sbr.rel (%p223) target = $region40
        $region39: #{tpu_custom_call.1} parent=31 // pred_region
          %226 = vst [vmem:[%s215] sm:$0x1] 0.0
        $region40: #{tpu_custom_call.1} parent=31 // pred_fallthru
          _
        %v227 = vld [vmem:[%s190] sm:$0x7]
        %v228 = vld [vmem:[%s220] sm:$0x1]
        %v229 = vld [vmem:[%s2] sm:$0x7]
        %vm230 = vcmask 1042432
        %v231 = vsel %vm230, %v227, -inf
        %v232 = vrot.slane %v231, 4
        %v233 = vmax.f32 %v231, %v232
        %v234 = vrot.slane %v233, 2
        %v235 = vmax.f32 %v233, %v234
        %v236 = vrot.slane %v235, 1
        %v237 = vmax.f32 %v235, %v236
        %v238 = vsub.f32 %v227, %v237
        %v239 = vmul.f32 %v238, 1.442695
        %v240 = vpow.pop %v239
        %v241 = vsel %vm230, %v240, 0.0
        %v242 = vrot.slane %v241, 4
        %v243 = vadd.f32 %v241, %v242
        %v244 = vrot.slane %v243, 2
        %v245 = vadd.f32 %v243, %v244
        %v246 = vrot.slane %v245, 1
        %v247 = vadd.f32 %v245, %v246
        %v248 = vlog2.pop %v247
        %v249 = vmul.f32 %v248, 0.6931472
        %v250 = vsub.f32 %v238, %v249
        %v251 = vlaneseq
        %v252 = vshrl.u32 %v251, 7
        %v253 = vlaneseq
        %v254 = vshrl.u32 %v253, 7
        %v255 = vsub.s32 0, %v254
        %v256 = vrot.slane %v228, %v255
        %vm257 = vcmp.eq.s32.totalorder %v252, %v256
        %v258 = vsel %vm257, 1, 0
        %v259 = vcvt.s32.f32 %v258
        %v260 = vmul.f32 %v250, %v259
        %v261 = vsel %vm230, %v260, 0.0
        %v262 = vrot.slane %v261, 4
        %v263 = vadd.f32 %v261, %v262
        %v264 = vrot.slane %v263, 2
        %v265 = vadd.f32 %v263, %v264
        %v266 = vrot.slane %v265, 1
        %v267 = vadd.f32 %v265, %v266
        %269 = vset.pattern.permute.xlu0 0
        %270 = vperm.xlu0 %269, %v229
        %v271 = vpop.permute.xlu0 %270
        %v273 = vmul.f32 %v271, %v259
        %v274 = vsel %vm230, %v273, 0.0
        %v275 = vrot.slane %v274, 4
        %v276 = vadd.f32 %v274, %v275
        %v277 = vrot.slane %v276, 2
        %v278 = vadd.f32 %v276, %v277
        %v279 = vrot.slane %v278, 1
        %v280 = vadd.f32 %v278, %v279
        %v281 = vmul.f32 %v267, 1.442695
        %v282 = vpow.pop %v281
        %v283 = vsub.f32 1.0, %v282
        %v284 = vmax.f32 %v283, 0.0
        %v285 = vmul.f32 %v284, %v284
        %v286 = vsub.f32 0.0, %v280
        %v287 = vmul.f32 %v286, %v285
        %v288 = vmul.f32 %v287, %v267
        %v289 = vld [vmem:[%s215] sm:$0x1]
        %v290 = vadd.f32 %v289, %v288
        %291 = vst [vmem:[%s215] sm:$0x1] %v290
        %s292 = sand.u32 %s117, 1
        %s293 = scalar_lea.sflag [#allocation4], %s292
        %s294 = sand.u32 %s117, 1
        %s295 = scalar_lea.vmem [#allocation5], %s294
        // Predicated region
        $region41: #{tpu_custom_call.1} parent=31 // pred_check
          %p296 = pneg %p127
        $region42: #{tpu_custom_call.1} parent=31 // pred_check_branch
          %298 = sbr.rel (%p296) target = $region44
        $region43: #{tpu_custom_call.1} parent=31 // pred_region
          %s300 = ssub.s32 16, 16
          %301 = vsyncadd %s293, %s300
          %s302 = smul.addr %s24, 16
          %s303 = scalar_lea.hbm %s3, %s302
          %s305 = sshll.u32 %s295, 4
          %s306 = int_to_ptr.vmem [resolvable:$true] %s305
          %308 = dma.vmem_to_hbm [thread:$0]  %s306, 16, %s303, %s293
        $region44: #{tpu_custom_call.1} parent=31 // pred_fallthru
          _
      $region32: #{tpu_custom_call.1} parent=5 // pred_fallthru
        _
      %p309 = scmp.le.s32.totalorder 2, %s15
      // Predicated region
      $region45: #{tpu_custom_call.1} parent=5 // pred_check
        %p310 = pneg %p309
      $region46: #{tpu_custom_call.1} parent=5 // pred_check_branch
        %312 = sbr.rel (%p310) target = $region48
      $region47: #{tpu_custom_call.1} parent=5 // pred_region
        %s313 = ssub.s32 %s15, 2
        // Predicated region
        $region49: #{tpu_custom_call.1} parent=47 // pred_check
          %p314 = pneg %p133
        $region50: #{tpu_custom_call.1} parent=47 // pred_check_branch
          %316 = sbr.rel (%p314) target = $region52
        $region51: #{tpu_custom_call.1} parent=47 // pred_region
          %s317 = sand.u32 %s118, 1
          %s318 = scalar_lea.sflag [#allocation4], %s317
          %s319 = sand.u32 %s118, 1
          %s320 = scalar_lea.vmem [#allocation5], %s319
          %321 = dma.done %s318, 16
        $region52: #{tpu_custom_call.1} parent=47 // pred_fallthru
          _
      $region48: #{tpu_custom_call.1} parent=5 // pred_fallthru
        _
    $region6: #{tpu_custom_call.1} parent=1 // loop_footer
      %s19 = sadd.s32 1, %s15
    $region7: #{tpu_custom_call.1} parent=1 // loop_footer_branch
      %14 = sbr.rel target = $region3
    $region8: #{tpu_custom_call.1} parent=1 // loop_exit
      _
    %322 = vsyncpa [#allocation3], 1
    %s323 = scalar_lea.sflag [#allocation3], 1
    %324 = vsyncpa %s323, 1
    %325 = vsyncpa [#allocation4], 1
    %s326 = scalar_lea.sflag [#allocation4], 1
    %327 = vsyncpa %s326, 1

</llo_original>
